<compile_context>
chip_gen: v7x
topology: tpu7x:2x2x1
jax: 0.10.0
libtpu: 0.0.40
codegen_flags: <defaults>
</compile_context>

<pallas_src>
import functools

import jax
import jax.numpy as jnp
from jax import lax
from jax.experimental import pallas as pl
from jax.experimental.pallas import tpu as pltpu

_EPS = 1e-8  # matches F.cosine_similarity default eps


def _round_up(x, m):
    return ((x + m - 1) // m) * m


def _pick_tile_rows(batch, feat, itemsize, block_rows=None):
    """Pick the batch-tile row count (byte-sized, MXU/v7x aware)."""
    if block_rows is not None:
        tb = max(8, int(block_rows))
    else:
        target_bytes = 2 << 20  # ~2 MiB embedding slab per grid step
        tb = max(8, target_bytes // max(1, feat * itemsize))
    # Keep both v7x TensorCores busy when the batch is large enough.
    if batch >= 512:
        tb = min(tb, _round_up(pl.cdiv(batch, 2), 256))
    # Don't make the tile (much) larger than the batch itself.
    tb = min(tb, max(8, batch))
    # Fill the 256-wide MXU M dim for big tiles; 8-row granule otherwise.
    granule = 256 if tb >= 256 else 8
    return _round_up(tb, granule)


def _assignment_loss_kernel(emb_ref, lab_ref, proto_ref, p2_ref, out_ref, *,
                            batch, block_rows):
    i = pl.program_id(0)

    e = emb_ref[...]                  # (TB, D) native dtype -> MXU
    p = proto_ref[...]                # (P, D)  native dtype -> MXU
    lab = lab_ref[...]                # (TB, 1) int32
    p2 = p2_ref[...]                  # (1, P)  f32 precomputed squared norms

    tb = e.shape[0]
    num_protos = p.shape[0]
    eps2 = jnp.float32(_EPS * _EPS)

    # S[r, k] = <e_r, p_k> -- single MXU matmul in the input dtype, f32 acc.
    s = lax.dot_general(e, p, (((1,), (1,)), ((), ())),
                        preferred_element_type=jnp.float32)        # (TB, P)

    # In-kernel gather of the labeled column and labeled prototype norm via a
    # single one-hot select (no per-row DMAs, no label-OOB DMA hazard).
    onehot = (lab == lax.broadcasted_iota(jnp.int32, (tb, num_protos), 1)
              ).astype(jnp.float32)                                # (TB, P)
    dot_sel = jnp.sum(s * onehot, axis=-1, keepdims=True)          # (TB, 1)
    p2_sel = jnp.sum(onehot * p2, axis=-1, keepdims=True)          # (TB, 1)

    # Embedding squared norms; upcast only this path (norm math stays f32,
    # required on v5e whose VPU has no bf16).
    ef = e.astype(jnp.float32)
    e2 = jnp.sum(ef * ef, axis=-1, keepdims=True)                  # (TB, 1)

    # PyTorch F.cosine_similarity eps: clamp the *product* of squared norms.
    cos = dot_sel * lax.rsqrt(jnp.maximum(e2 * p2_sel, eps2))      # (TB, 1)

    # Mask tail / padded rows BEFORE the cross-row reduction (garbage rows
    # past `batch` must never reach the partial sum).
    row = i * block_rows + lax.broadcasted_iota(jnp.int32, (tb, 1), 0)
    cos = jnp.where(row < batch, cos, 0.0)

    # One partial sum per tile; replicate across the (8,128) output slab so
    # the block write is a full, unmasked vst.
    partial = jnp.sum(cos)
    out_ref[...] = jnp.full(out_ref.shape, partial, jnp.float32)


def assignment_loss(embeddings, labels, prototypes, *, block_rows=None):
    """embeddings: [B, D] float, labels: [B] int, prototypes: [P, D] float."""
    B, D = embeddings.shape
    P = prototypes.shape[0]

    labels2d = labels.astype(jnp.int32).reshape(B, 1)
    # Prototype squared norms: computed ONCE here (tiny), not per grid step.
    p2 = jnp.sum(prototypes.astype(jnp.float32) ** 2, axis=-1).reshape(1, P)

    emb_bytes = jnp.dtype(embeddings.dtype).itemsize
    proto_bytes = jnp.dtype(prototypes.dtype).itemsize

    tb = _pick_tile_rows(B, D, emb_bytes, block_rows)
    num_tiles = pl.cdiv(B, tb)

    kernel = functools.partial(_assignment_loss_kernel, batch=B, block_rows=tb)

    # Explicit VMEM budget: double-buffered embedding slab + labels,
    # single-buffered prototype table + p2 row, output block, plus headroom.
    need = (2 * tb * D * emb_bytes
            + 2 * tb * 4
            + P * D * proto_bytes
            + 2 * P * 4
            + 2 * 8 * 128 * 4)
    vmem_limit = int(min(48 << 20, max(16 << 20, 2 * need + (2 << 20))))

    cost = pl.CostEstimate(
        flops=2 * B * P * D + 2 * B * D + 4 * B * P,
        transcendentals=B,
        bytes_accessed=(B * D * emb_bytes + B * 4
                        + P * D * proto_bytes + P * 4
                        + num_tiles * 8 * 128 * 4),
    )

    # Single-buffer the constant-index blocks (prototypes, p2); the default
    # double buffering buys nothing for a block that never changes.
    const_kwargs = {}
    if hasattr(pl, "Buffered"):
        const_kwargs["pipeline_mode"] = pl.Buffered(1)

    partials = pl.pallas_call(
        kernel,
        out_shape=jax.ShapeDtypeStruct((num_tiles, 8, 128), jnp.float32),
        grid=(num_tiles,),
        in_specs=[
            # (TB, D) embedding slab per grid step (native dtype).
            pl.BlockSpec((tb, D), lambda i: (i, 0)),
            # (TB, 1) label column per grid step.
            pl.BlockSpec((tb, 1), lambda i: (i, 0)),
            # Full prototype table resident in VMEM, single-buffered.
            pl.BlockSpec((P, D), lambda i: (0, 0), **const_kwargs),
            # Precomputed prototype squared norms, single-buffered.
            pl.BlockSpec((1, P), lambda i: (0, 0), **const_kwargs),
        ],
        # Independent per-tile partial-sum blocks -> "parallel" grid axis.
        out_specs=pl.BlockSpec((1, 8, 128), lambda i: (i, 0, 0)),
        compiler_params=pltpu.CompilerParams(
            dimension_semantics=("parallel",),
            vmem_limit_bytes=vmem_limit,
        ),
        cost_estimate=cost,
    )(embeddings, labels2d, prototypes, p2)

    return 1.0 - jnp.sum(partials[:, 0, 0]) / jnp.float32(B)


def _reference_loss(embeddings, labels, prototypes):
    """Pure-JAX reference with F.cosine_similarity's product-clamped eps."""
    e = embeddings.astype(jnp.float32)
    p = prototypes.astype(jnp.float32)[labels]
    dot = jnp.sum(e * p, axis=-1)
    e2 = jnp.sum(e * e, axis=-1)
    p2 = jnp.sum(p * p, axis=-1)
    cos = dot / jnp.sqrt(jnp.maximum(e2 * p2, _EPS * _EPS))
    return 1.0 - jnp.mean(cos)


if __name__ == "__main__":
    key = jax.random.PRNGKey(0)
    k_emb, k_proto, k_lab = jax.random.split(key, 3)

    B, D, P = 200, 128, 5  # batch (non-multiple of tile), feature dim, #prototypes
    embeddings = jax.random.normal(k_emb, (B, D), dtype=jnp.float32)
    prototypes = jax.random.normal(k_proto, (P, D), dtype=jnp.float32)
    labels = jax.random.randint(k_lab, (B,), 0, P, dtype=jnp.int32)

    # Small block_rows -> multiple tiles + a masked tail tile are exercised.
    loss = assignment_loss(embeddings, labels, prototypes, block_rows=64)
    jax.block_until_ready(loss)

    # Default byte-sized tiling (single padded tile at these shapes).
    loss_default = assignment_loss(embeddings, labels, prototypes)
    jax.block_until_ready(loss_default)

    ref = _reference_loss(embeddings, labels, prototypes)
    assert jnp.allclose(loss, ref, atol=1e-5), (loss, ref)
    assert jnp.allclose(loss_default, ref, atol=1e-5), (loss_default, ref)
    print("KERNEL_OK")
</pallas_src>

<mosaic_0001>
module attributes {stable_mosaic.version = 11 : i64} {
  func.func @_assignment_loss_kernel(%arg0: i32, %arg1: memref<64x128xf32, #tpu.memory_space<vmem>>, %arg2: memref<64x1xi32, #tpu.memory_space<vmem>>, %arg3: memref<5x128xf32, #tpu.memory_space<vmem>>, %arg4: memref<1x5xf32, #tpu.memory_space<vmem>>, %arg5: memref<1x8x128xf32, #tpu.memory_space<vmem>>) attributes {dimension_semantics = [#tpu.dimension_semantics<parallel>], iteration_bounds = array<i64: 4>, scalar_prefetch = 0 : i64, scratch_operands = 0 : i64, tpu.core_type = #tpu.core_type<tc>, window_params = [{transform_indices = @transform_0, window_bounds = array<i64: 64, 128>}, {transform_indices = @transform_1, window_bounds = array<i64: 64, 1>}, {pipeline_mode = #tpu.pipeline_mode<synchronous>, transform_indices = @transform_2, window_bounds = array<i64: 5, 128>}, {pipeline_mode = #tpu.pipeline_mode<synchronous>, transform_indices = @transform_3, window_bounds = array<i64: 1, 5>}, {transform_indices = @transform_4, window_bounds = array<i64: 1, 8, 128>}]} {
    %c0 = arith.constant 0 : index
    %c0_0 = arith.constant 0 : index
    %0 = vector.load %arg1[%c0, %c0_0] : memref<64x128xf32, #tpu.memory_space<vmem>>, vector<64x128xf32>
    %c0_1 = arith.constant 0 : index
    %c0_2 = arith.constant 0 : index
    %1 = vector.load %arg3[%c0_1, %c0_2] : memref<5x128xf32, #tpu.memory_space<vmem>>, vector<5x128xf32>
    %c0_3 = arith.constant 0 : index
    %c0_4 = arith.constant 0 : index
    %2 = vector.load %arg2[%c0_3, %c0_4] : memref<64x1xi32, #tpu.memory_space<vmem>>, vector<64x1xi32>
    %c0_5 = arith.constant 0 : index
    %c0_6 = arith.constant 0 : index
    %3 = vector.load %arg4[%c0_5, %c0_6] : memref<1x5xf32, #tpu.memory_space<vmem>>, vector<1x5xf32>
    %cst = arith.constant dense<0.000000e+00> : vector<64x5xf32>
    %4 = tpu.matmul %0, %1, %cst {dimension_numbers = #tpu.dot_dimension_numbers<[1], [1], [0], [0], [0, 0, 1, 0], [], []>} : vector<64x128xf32>, vector<5x128xf32>, vector<64x5xf32> -> vector<64x5xf32>
    %5 = tpu.iota {dimensions = array<i32: 1>} : vector<64x5xi32>
    %6 = vector.broadcast %2 : vector<64x1xi32> to vector<64x5xi32>
    %7 = arith.cmpi eq, %6, %5 : vector<64x5xi32>
    %8 = arith.extui %7 : vector<64x5xi1> to vector<64x5xi32>
    %9 = arith.sitofp %8 : vector<64x5xi32> to vector<64x5xf32>
    %10 = arith.mulf %4, %9 : vector<64x5xf32>
    %cst_7 = arith.constant dense<0.000000e+00> : vector<64xf32>
    %11 = vector.multi_reduction <add>, %10, %cst_7 [1] : vector<64x5xf32> to vector<64xf32>
    %12 = vector.shape_cast %11 : vector<64xf32> to vector<64x1xf32>
    %13 = vector.broadcast %3 : vector<1x5xf32> to vector<64x5xf32>
    %14 = arith.mulf %9, %13 : vector<64x5xf32>
    %cst_8 = arith.constant dense<0.000000e+00> : vector<64xf32>
    %15 = vector.multi_reduction <add>, %14, %cst_8 [1] : vector<64x5xf32> to vector<64xf32>
    %16 = vector.shape_cast %15 : vector<64xf32> to vector<64x1xf32>
    %17 = arith.mulf %0, %0 : vector<64x128xf32>
    %cst_9 = arith.constant dense<0.000000e+00> : vector<64xf32>
    %18 = vector.multi_reduction <add>, %17, %cst_9 [1] : vector<64x128xf32> to vector<64xf32>
    %19 = vector.shape_cast %18 : vector<64xf32> to vector<64x1xf32>
    %20 = arith.mulf %19, %16 : vector<64x1xf32>
    %cst_10 = arith.constant 1.000000e-16 : f32
    %21 = vector.broadcast %cst_10 : f32 to vector<64x1xf32>
    %22 = arith.maximumf %20, %21 : vector<64x1xf32>
    %23 = math.rsqrt %22 : vector<64x1xf32>
    %24 = arith.mulf %12, %23 : vector<64x1xf32>
    %c64_i32 = arith.constant 64 : i32
    %25 = arith.muli %arg0, %c64_i32 : i32
    %26 = tpu.iota {dimensions = array<i32: 0>} : vector<64x1xi32>
    %27 = vector.broadcast %25 : i32 to vector<64x1xi32>
    %28 = arith.addi %27, %26 : vector<64x1xi32>
    %c200_i32 = arith.constant 200 : i32
    %29 = vector.broadcast %c200_i32 : i32 to vector<64x1xi32>
    %30 = arith.cmpi slt, %28, %29 : vector<64x1xi32>
    %cst_11 = arith.constant 0.000000e+00 : f32
    %31 = vector.broadcast %cst_11 : f32 to vector<64x1xf32>
    %32 = arith.select %30, %24, %31 : vector<64x1xi1>, vector<64x1xf32>
    %33 = vector.shape_cast %32 : vector<64x1xf32> to vector<1x64x1xf32>
    %cst_12 = arith.constant dense<0.000000e+00> : vector<1xf32>
    %34 = vector.multi_reduction <add>, %33, %cst_12 [1, 2] : vector<1x64x1xf32> to vector<1xf32>
    %35 = vector.shape_cast %34 : vector<1xf32> to vector<1x1x1xf32>
    %36 = vector.extract %35[0, 0, 0] : f32 from vector<1x1x1xf32>
    %37 = vector.broadcast %36 : f32 to vector<1x8x128xf32>
    %c0_13 = arith.constant 0 : index
    %c0_14 = arith.constant 0 : index
    %c0_15 = arith.constant 0 : index
    %38 = vector.load %arg5[%c0_13, %c0_14, %c0_15] : memref<1x8x128xf32, #tpu.memory_space<vmem>>, vector<1x8x128xf32>
    tpu.vector_store %arg5[%c0_13, %c0_14, %c0_15], %37 {strides = array<i32>} : memref<1x8x128xf32, #tpu.memory_space<vmem>>, vector<1x8x128xf32>,
    return
  }
  func.func @transform_0(%arg0: i32) -> (i32, i32) {
    %c0_i32 = arith.constant 0 : i32
    %c0_i32_0 = arith.constant 0 : i32
    return %arg0, %c0_i32 : i32, i32
  }
  func.func @transform_1(%arg0: i32) -> (i32, i32) {
    %c0_i32 = arith.constant 0 : i32
    %c0_i32_0 = arith.constant 0 : i32
    return %arg0, %c0_i32 : i32, i32
  }
  func.func @transform_2(%arg0: i32) -> (i32, i32) {
    %c0_i32 = arith.constant 0 : i32
    %c0_i32_0 = arith.constant 0 : i32
    %c0_i32_1 = arith.constant 0 : i32
    return %c0_i32, %c0_i32_0 : i32, i32
  }
  func.func @transform_3(%arg0: i32) -> (i32, i32) {
    %c0_i32 = arith.constant 0 : i32
    %c0_i32_0 = arith.constant 0 : i32
    %c0_i32_1 = arith.constant 0 : i32
    return %c0_i32, %c0_i32_0 : i32, i32
  }
  func.func @transform_4(%arg0: i32) -> (i32, i32, i32) {
    %c0_i32 = arith.constant 0 : i32
    %c0_i32_0 = arith.constant 0 : i32
    %c0_i32_1 = arith.constant 0 : i32
    return %arg0, %c0_i32, %c0_i32_0 : i32, i32, i32
  }
}

</mosaic_0001>

<llo_original>
// kernel: tpu_custom_call.1
$region0: #{tpu_custom_call.1}
  #allocation0 [shape = 'u32[]', space=smem, size = 0x4, offset = 0x4, fixed_abs, tag = 'smem constant byte address 0x4 - core index']
  #allocation1 [shape = 'u32[144,128]{1,0:T(1,128)}', space=vmem, size = 0x12000, scoped, tag = 'internal scratch']
  %s0 = inlined_call_operand.vmem [shape: f32[200,128], index: 0, kind: input, shape index: {}]
  %s1 = inlined_call_operand.vmem [shape: s32[200,1], index: 1, kind: input, shape index: {}]
  %s2 = inlined_call_operand.vmem [shape: f32[5,128], index: 2, kind: input, shape index: {}]
  %s3 = inlined_call_operand.vmem [shape: f32[1,5], index: 3, kind: input, shape index: {}]
  %s4 = inlined_call_operand.hbm [shape: f32[4,8,128], index: 4, kind: output, shape index: {}]
  %s5 = sld [smem:[#allocation0]]
  $region49: #{tpu_custom_call.1} parent=0
    _
  %s7 = ssub.s32 1, %s5
  %s8 = scalar_select 0, %s7, %s5
  $region1: #{tpu_custom_call.1} parent=0
    #allocation2 [shape = 'u8[8192]{0}', space=vmem, size = 0x2000, scoped, tag = 'output window, operand 0']
    #allocation3 [shape = 's32[2]{0}', space=sflag, size = 0x8, scoped, tag = 'scoped memory for tpu_custom_call.1']
    %9 = vsyncpa [#allocation3], 0
    %s10 = scalar_lea.sflag [#allocation3], 1
    %11 = vsyncpa %s10, 0
    loop: start=0, step=1, limit=6
    $region2: #{tpu_custom_call.1} parent=1 // loop_pre_header
      _
    $region3: #{tpu_custom_call.1} parent=1 // loop_header
      %s13 = sphi 0, %s17
      %p14 = scmp.ge.s32.totalorder %s13, 6
      %s23 = sphi 0, %s25
      %s26 = sphi 0, %s23
      %s27 = sphi 0, %s26
      %s43 = sphi 0, %s27
      %s49 = sphi 0, %s51
      %s52 = sphi 0, %s49
      %s53 = sphi 0, %s52
      %s69 = sphi 0, %s53
      %s73 = sphi 0, %s73
      %s75 = sphi 0, %s73
      %s76 = sphi 0, %s75
      %s90 = sphi 0, %s76
      %s94 = sphi 0, %s94
      %s96 = sphi 0, %s94
      %s97 = sphi 0, %s96
      %s111 = sphi 0, %s97
      %s117 = sphi 0, %s119
      %s120 = sphi 0, %s117
      %s121 = sphi 0, %s120
      %s137 = sphi 0, %s121
    $region4: #{tpu_custom_call.1} parent=1 // loop_header_branch
      %16 = sbr.rel (%p14) target = $region8
    $region5: #{tpu_custom_call.1} parent=1 // loop_body
      %s18 = ssub.s32 %s13, 1
      %s19 = ssub.s32 %s13, 2
      %s20 = sadd.s32 %s13, 1
      %s21 = ssub.s32 %s13, %s20
      %p22 = scmp.eq.s32.totalorder %s21, 0
      %s24 = sadd.s32 %s23, 1
      %s25 = scalar_select %p22, %s23, %s24
      %p28 = pneg %p22
      %p29 = scmp.eq.s32.totalorder %s13, 3
      %p30 = por %p28, %p29
      %p31 = scmp.ne.s32.totalorder %s23, %s26
      %p32 = scmp.eq.s32.totalorder %s13, 0
      %p33 = por %p31, %p32
      %p34 = scmp.ne.s32.totalorder %s23, %s26
      %p35 = scmp.eq.s32.totalorder %s18, 3
      %p36 = por %p34, %p35
      %p37 = scmp.ne.s32.totalorder %s26, %s27
      %p38 = scmp.eq.s32.totalorder %s18, 0
      %p39 = por %p37, %p38
      %p40 = scmp.ne.s32.totalorder %s26, %s27
      %p41 = scmp.eq.s32.totalorder %s19, 3
      %p42 = por %p40, %p41
      %p44 = scmp.ne.s32.totalorder %s27, %s43
      %p45 = scmp.eq.s32.totalorder %s19, 0
      %p46 = por %p44, %p45
      %s47 = ssub.s32 %s13, %s20
      %p48 = scmp.eq.s32.totalorder %s47, 0
      %s50 = sadd.s32 %s49, 1
      %s51 = scalar_select %p48, %s49, %s50
      %p54 = pneg %p48
      %p55 = scmp.eq.s32.totalorder %s13, 3
      %p56 = por %p54, %p55
      %p57 = scmp.ne.s32.totalorder %s49, %s52
      %p58 = scmp.eq.s32.totalorder %s13, 0
      %p59 = por %p57, %p58
      %p60 = scmp.ne.s32.totalorder %s49, %s52
      %p61 = scmp.eq.s32.totalorder %s18, 3
      %p62 = por %p60, %p61
      %p63 = scmp.ne.s32.totalorder %s52, %s53
      %p64 = scmp.eq.s32.totalorder %s18, 0
      %p65 = por %p63, %p64
      %p66 = scmp.ne.s32.totalorder %s52, %s53
      %p67 = scmp.eq.s32.totalorder %s19, 3
      %p68 = por %p66, %p67
      %p70 = scmp.ne.s32.totalorder %s53, %s69
      %p71 = scmp.eq.s32.totalorder %s19, 0
      %p72 = por %p70, %p71
      %s74 = sadd.s32 %s73, 1
      %p77 = scmp.eq.s32.totalorder %s13, 3
      %p78 = scmp.ne.s32.totalorder %s73, %s75
      %p79 = scmp.eq.s32.totalorder %s13, 0
      %p80 = por %p78, %p79
      %p81 = scmp.ne.s32.totalorder %s73, %s75
      %p82 = scmp.eq.s32.totalorder %s18, 3
      %p83 = por %p81, %p82
      %p84 = scmp.ne.s32.totalorder %s75, %s76
      %p85 = scmp.eq.s32.totalorder %s18, 0
      %p86 = por %p84, %p85
      %p87 = scmp.ne.s32.totalorder %s75, %s76
      %p88 = scmp.eq.s32.totalorder %s19, 3
      %p89 = por %p87, %p88
      %p91 = scmp.ne.s32.totalorder %s76, %s90
      %p92 = scmp.eq.s32.totalorder %s19, 0
      %p93 = por %p91, %p92
      %s95 = sadd.s32 %s94, 1
      %p98 = scmp.eq.s32.totalorder %s13, 3
      %p99 = scmp.ne.s32.totalorder %s94, %s96
      %p100 = scmp.eq.s32.totalorder %s13, 0
      %p101 = por %p99, %p100
      %p102 = scmp.ne.s32.totalorder %s94, %s96
      %p103 = scmp.eq.s32.totalorder %s18, 3
      %p104 = por %p102, %p103
      %p105 = scmp.ne.s32.totalorder %s96, %s97
      %p106 = scmp.eq.s32.totalorder %s18, 0
      %p107 = por %p105, %p106
      %p108 = scmp.ne.s32.totalorder %s96, %s97
      %p109 = scmp.eq.s32.totalorder %s19, 3
      %p110 = por %p108, %p109
      %p112 = scmp.ne.s32.totalorder %s97, %s111
      %p113 = scmp.eq.s32.totalorder %s19, 0
      %p114 = por %p112, %p113
      %s115 = ssub.s32 %s13, %s20
      %p116 = scmp.eq.s32.totalorder %s115, 0
      %s118 = sadd.s32 %s117, 1
      %s119 = scalar_select %p116, %s117, %s118
      %p122 = pneg %p116
      %p123 = scmp.eq.s32.totalorder %s13, 3
      %p124 = por %p122, %p123
      %p125 = scmp.ne.s32.totalorder %s117, %s120
      %p126 = scmp.eq.s32.totalorder %s13, 0
      %p127 = por %p125, %p126
      %p128 = scmp.ne.s32.totalorder %s117, %s120
      %p129 = scmp.eq.s32.totalorder %s18, 3
      %p130 = por %p128, %p129
      %p131 = scmp.ne.s32.totalorder %s120, %s121
      %p132 = scmp.eq.s32.totalorder %s18, 0
      %p133 = por %p131, %p132
      %p134 = scmp.ne.s32.totalorder %s120, %s121
      %p135 = scmp.eq.s32.totalorder %s19, 3
      %p136 = por %p134, %p135
      %p138 = scmp.ne.s32.totalorder %s121, %s137
      %p139 = scmp.eq.s32.totalorder %s19, 0
      %p140 = por %p138, %p139
      %p141 = scmp.le.s32.totalorder 1, %s13
      %p142 = scmp.lt.s32.totalorder %s13, 5
      %p143 = pnand %p141, %p142
      %p144 = pneg %p143
      // Predicated region
      $region9: #{tpu_custom_call.1} parent=5 // pred_check
        _
      $region10: #{tpu_custom_call.1} parent=5 // pred_check_branch
        %146 = sbr.rel (%p143) target = $region12
      $region11: #{tpu_custom_call.1} parent=5 // pred_region
        %s147 = ssub.s32 %s13, 1
        // Predicated region
        $region13: #{tpu_custom_call.1} parent=11 // pred_check
          %p148 = pneg %p86
        $region14: #{tpu_custom_call.1} parent=11 // pred_check_branch
          %150 = sbr.rel (%p148) target = $region16
        $region15: #{tpu_custom_call.1} parent=11 // pred_region
          _
        $region16: #{tpu_custom_call.1} parent=11 // pred_fallthru
          _
        // Predicated region
        $region17: #{tpu_custom_call.1} parent=11 // pred_check
          %p151 = pneg %p107
        $region18: #{tpu_custom_call.1} parent=11 // pred_check_branch
          %153 = sbr.rel (%p151) target = $region20
        $region19: #{tpu_custom_call.1} parent=11 // pred_region
          _
        $region20: #{tpu_custom_call.1} parent=11 // pred_fallthru
          _
      $region12: #{tpu_custom_call.1} parent=5 // pred_fallthru
        _
      %p154 = scmp.lt.s32.totalorder %s13, 4
      // Predicated region
      $region21: #{tpu_custom_call.1} parent=5 // pred_check
        %p155 = pneg %p154
      $region22: #{tpu_custom_call.1} parent=5 // pred_check_branch
        %157 = sbr.rel (%p155) target = $region24
      $region23: #{tpu_custom_call.1} parent=5 // pred_region
        // Predicated region
        $region25: #{tpu_custom_call.1} parent=23 // pred_check
          %p158 = pneg %p33
        $region26: #{tpu_custom_call.1} parent=23 // pred_check_branch
          %160 = sbr.rel (%p158) target = $region28
        $region27: #{tpu_custom_call.1} parent=23 // pred_region
          %s161 = smul.u32 8, %s13
          %s162 = ssub.s32 25, %s161
          %p163 = scmp.lt.s32.totalorder %s162, 8
          %s164 = scalar_select %p163, %s162, 8
          %s165 = smul.u32 128, %s164
          %p166 = scmp.lt.s32.totalorder %s161, 24
          %s167 = scalar_select %p166, %s161, 24
          %s168 = smul.addr %s167, 8
          %s169 = scalar_lea.vmem %s0, %s168
          %s170 = smul.u32 8, %s13
          %s171 = ssub.s32 25, %s170
          %p172 = scmp.lt.s32.totalorder %s171, 8
          %s173 = scalar_select %p172, %s171, 8
          %s174 = smul.u32 128, %s173
        $region28: #{tpu_custom_call.1} parent=23 // pred_fallthru
          _
        // Predicated region
        $region29: #{tpu_custom_call.1} parent=23 // pred_check
          %p175 = pneg %p59
        $region30: #{tpu_custom_call.1} parent=23 // pred_check_branch
          %177 = sbr.rel (%p175) target = $region32
        $region31: #{tpu_custom_call.1} parent=23 // pred_region
          %s178 = smul.u32 8, %s13
          %s179 = ssub.s32 25, %s178
          %p180 = scmp.lt.s32.totalorder %s179, 8
          %s181 = scalar_select %p180, %s179, 8
          %s182 = smul.u32 128, %s181
          %p183 = scmp.lt.s32.totalorder %s178, 24
          %s184 = scalar_select %p183, %s178, 24
          %s185 = smul.addr %s184, 8
          %s186 = scalar_lea.vmem %s1, %s185
          %s187 = smul.u32 8, %s13
          %s188 = ssub.s32 25, %s187
          %p189 = scmp.lt.s32.totalorder %s188, 8
          %s190 = scalar_select %p189, %s188, 8
          %s191 = smul.u32 128, %s190
        $region32: #{tpu_custom_call.1} parent=23 // pred_fallthru
          _
      $region24: #{tpu_custom_call.1} parent=5 // pred_fallthru
        _
      %p192 = scmp.le.s32.totalorder 1, %s13
      %p193 = scmp.lt.s32.totalorder %s13, 5
      %p194 = pnand %p192, %p193
      %p195 = pneg %p194
      // Predicated region
      $region33: #{tpu_custom_call.1} parent=5 // pred_check
        _
      $region34: #{tpu_custom_call.1} parent=5 // pred_check_branch
        %197 = sbr.rel (%p194) target = $region36
      $region35: #{tpu_custom_call.1} parent=5 // pred_region
        %s198 = ssub.s32 %s13, 1
        %s199 = smul.u32 8, %s18
        %s200 = ssub.s32 25, %s199
        %p201 = scmp.lt.s32.totalorder %s200, 8
        %s202 = scalar_select %p201, %s200, 8
        %s203 = smul.u32 128, %s202
        %p204 = scmp.lt.s32.totalorder %s199, 24
        %s205 = scalar_select %p204, %s199, 24
        %s206 = smul.addr %s205, 8
        %s207 = scalar_lea.vmem %s0, %s206
        %p208 = pneg %p39
        %p209 = pneg %p36
        %s210 = smul.u32 8, %s18
        %s211 = ssub.s32 25, %s210
        %p212 = scmp.lt.s32.totalorder %s211, 8
        %s213 = scalar_select %p212, %s211, 8
        %s214 = smul.u32 128, %s213
        %p215 = scmp.lt.s32.totalorder %s210, 24
        %s216 = scalar_select %p215, %s210, 24
        %s217 = smul.addr %s216, 8
        %s218 = scalar_lea.vmem %s1, %s217
        %p219 = pneg %p65
        %p220 = pneg %p62
        %p221 = pneg %p86
        %p222 = pneg %p83
        %p223 = pneg %p107
        %p224 = pneg %p104
        %p225 = pneg %p133
        %p226 = pneg %p130
        %s227 = sand.u32 %s120, 1
        %s228 = scalar_lea.sflag [#allocation3], %s227
        %s229 = sand.u32 %s120, 1
        %s230 = smul.addr %s229, 8
        %s231 = scalar_lea.vmem [#allocation2], %s230
        %s232 = smul.u32 8, %s18
        %s233 = ssub.s32 25, %s232
        %p234 = scmp.lt.s32.totalorder %s233, 8
        %s235 = scalar_select %p234, %s233, 8
        %s236 = smul.u32 128, %s235
        %p237 = scmp.lt.s32.totalorder %s232, 24
        %s238 = scalar_select %p237, %s232, 24
        %s239 = smul.addr %s238, 8
        %s240 = scalar_lea.vmem %s0, %s239
        %s241 = smul.u32 8, %s18
        %s242 = ssub.s32 25, %s241
        %p243 = scmp.lt.s32.totalorder %s242, 8
        %s244 = scalar_select %p243, %s242, 8
        %s245 = smul.u32 128, %s244
        %s246 = smul.u32 8, %s18
        %s247 = ssub.s32 25, %s246
        %p248 = scmp.lt.s32.totalorder %s247, 8
        %s249 = scalar_select %p248, %s247, 8
        %s250 = smul.u32 128, %s249
        %p251 = scmp.lt.s32.totalorder %s246, 24
        %s252 = scalar_select %p251, %s246, 24
        %s253 = smul.addr %s252, 8
        %s254 = scalar_lea.vmem %s1, %s253
        %s255 = smul.u32 8, %s18
        %s256 = ssub.s32 25, %s255
        %p257 = scmp.lt.s32.totalorder %s256, 8
        %s258 = scalar_select %p257, %s256, 8
        %s259 = smul.u32 128, %s258
        %v260 = vld [vmem:[%s240] sm:$0xff]
        %v261 = vld [vmem:[%s240 + $0x8] sm:$0xff]
        %v262 = vld [vmem:[%s240 + $0x10] sm:$0xff]
        %v263 = vld [vmem:[%s240 + $0x18] sm:$0xff]
        %v264 = vld [vmem:[%s240 + $0x20] sm:$0xff]
        %v265 = vld [vmem:[%s240 + $0x28] sm:$0xff]
        %v266 = vld [vmem:[%s240 + $0x30] sm:$0xff]
        %v267 = vld [vmem:[%s240 + $0x38] sm:$0xff]
        %v268 = vld [vmem:[%s2] sm:$0x1f]
        %v269 = vld [vmem:[%s254] sm:$0xff]
        %v270 = vld [vmem:[%s254 + $0x8] sm:$0xff]
        %v271 = vld [vmem:[%s254 + $0x10] sm:$0xff]
        %v272 = vld [vmem:[%s254 + $0x18] sm:$0xff]
        %v273 = vld [vmem:[%s254 + $0x20] sm:$0xff]
        %v274 = vld [vmem:[%s254 + $0x28] sm:$0xff]
        %v275 = vld [vmem:[%s254 + $0x30] sm:$0xff]
        %v276 = vld [vmem:[%s254 + $0x38] sm:$0xff]
        %v277 = vld [vmem:[%s3] sm:$0x1]
        %278 = vmatprep.subr.mxu0 0.0
        %279 = vmatpush1.xpose.msra.mxu0 %v268
        %280 = vmatprep.subr.mxu0 0.0
        %281 = vmatpush1.xpose.msra.mxu0 0.0
        %282 = vmatprep.subr.mxu0 0.0
        %283 = vmatpush1.xpose.msra.mxu0 0.0
        %284 = vmatprep.subr.mxu0 0.0
        %285 = vmatpush1.xpose.msra.mxu0 0.0
        %286 = vmatprep.subr.mxu0 0.0
        %287 = vmatpush1.xpose.msra.mxu0 0.0
        %288 = vmatprep.subr.mxu0 0.0
        %289 = vmatpush1.xpose.msra.mxu0 0.0
        %290 = vmatprep.subr.mxu0 0.0
        %291 = vmatpush1.xpose.msra.mxu0 0.0
        %292 = vmatprep.subr.mxu0 0.0
        %293 = vmatpush1.xpose.msra.mxu0 0.0
        %294 = vmatprep.subr.mxu0 0.0
        %295 = vmatpush1.xpose.msra.mxu0 0.0
        %296 = vmatprep.subr.mxu0 0.0
        %297 = vmatpush1.xpose.msra.mxu0 0.0
        %298 = vmatprep.subr.mxu0 0.0
        %299 = vmatpush1.xpose.msra.mxu0 0.0
        %300 = vmatprep.subr.mxu0 0.0
        %301 = vmatpush1.xpose.msra.mxu0 0.0
        %302 = vmatprep.subr.mxu0 0.0
        %303 = vmatpush1.xpose.msra.mxu0 0.0
        %304 = vmatprep.subr.mxu0 0.0
        %305 = vmatpush1.xpose.msra.mxu0 0.0
        %306 = vmatprep.subr.mxu0 0.0
        %307 = vmatpush1.xpose.msra.mxu0 0.0
        %308 = vmatprep.subr.mxu0 0.0
        %309 = vmatpush1.xpose.msra.mxu0 0.0
        %310 = vmatprep.subr.mxu0 0.0
        %311 = vmatpush1.xpose.msra.mxu0 0.0
        %312 = vmatprep.subr.mxu0 0.0
        %313 = vmatpush1.xpose.msra.mxu0 0.0
        %314 = vmatprep.subr.mxu0 0.0
        %315 = vmatpush1.xpose.msra.mxu0 0.0
        %316 = vmatprep.subr.mxu0 0.0
        %317 = vmatpush1.xpose.msra.mxu0 0.0
        %318 = vmatprep.subr.mxu0 0.0
        %319 = vmatpush1.xpose.msra.mxu0 0.0
        %320 = vmatprep.subr.mxu0 0.0
        %321 = vmatpush1.xpose.msra.mxu0 0.0
        %322 = vmatprep.subr.mxu0 0.0
        %323 = vmatpush1.xpose.msra.mxu0 0.0
        %324 = vmatprep.subr.mxu0 0.0
        %325 = vmatpush1.xpose.msra.mxu0 0.0
        %326 = vmatprep.subr.mxu0 0.0
        %327 = vmatpush1.xpose.msra.mxu0 0.0
        %328 = vmatprep.subr.mxu0 0.0
        %329 = vmatpush1.xpose.msra.mxu0 0.0
        %330 = vmatprep.subr.mxu0 0.0
        %331 = vmatpush1.xpose.msra.mxu0 0.0
        %332 = vmatprep.subr.mxu0 0.0
        %333 = vmatpush1.xpose.msra.mxu0 0.0
        %334 = vmatprep.subr.mxu0 0.0
        %335 = vmatpush1.xpose.msra.mxu0 0.0
        %336 = vmatprep.subr.mxu0 0.0
        %337 = vmatpush1.xpose.msra.mxu0 0.0
        %338 = vmatprep.subr.mxu0 0.0
        %339 = vmatpush1.xpose.msra.mxu0 0.0
        %340 = vmatprep.subr.mxu0 0.0
        %341 = vmatpush1.xpose.msra.mxu0 0.0
        %342 = vmatprep.mubr.f32.mxu0 0.0
        %343 = vmatmul.mubr.f32.gmra.mrb[0].mxu0 %v260
        %v344 = vpop.f32.mrb[0].mxu0
        %v345 = vadd.f32 0.0, %v344
        %v346 = vpop.f32.mrb[0].mxu0
        %347 = vmatprep.mubr.f32.mxu0 0.0
        %348 = vmatmul.mubr.f32.gmra.mrb[0].mxu0 %v261
        %v349 = vpop.f32.mrb[0].mxu0
        %v350 = vadd.f32 0.0, %v349
        %v351 = vpop.f32.mrb[0].mxu0
        %352 = vmatprep.mubr.f32.mxu0 0.0
        %353 = vmatmul.mubr.f32.gmra.mrb[0].mxu0 %v262
        %v354 = vpop.f32.mrb[0].mxu0
        %v355 = vadd.f32 0.0, %v354
        %v356 = vpop.f32.mrb[0].mxu0
        %357 = vmatprep.mubr.f32.mxu0 0.0
        %358 = vmatmul.mubr.f32.gmra.mrb[0].mxu0 %v263
        %v359 = vpop.f32.mrb[0].mxu0
        %v360 = vadd.f32 0.0, %v359
        %v361 = vpop.f32.mrb[0].mxu0
        %362 = vmatprep.mubr.f32.mxu0 0.0
        %363 = vmatmul.mubr.f32.gmra.mrb[0].mxu0 %v264
        %v364 = vpop.f32.mrb[0].mxu0
        %v365 = vadd.f32 0.0, %v364
        %v366 = vpop.f32.mrb[0].mxu0
        %367 = vmatprep.mubr.f32.mxu0 0.0
        %368 = vmatmul.mubr.f32.gmra.mrb[0].mxu0 %v265
        %v369 = vpop.f32.mrb[0].mxu0
        %v370 = vadd.f32 0.0, %v369
        %v371 = vpop.f32.mrb[0].mxu0
        %372 = vmatprep.mubr.f32.mxu0 0.0
        %373 = vmatmul.mubr.f32.gmra.mrb[0].mxu0 %v266
        %v374 = vpop.f32.mrb[0].mxu0
        %v375 = vadd.f32 0.0, %v374
        %v376 = vpop.f32.mrb[0].mxu0
        %377 = vmatprep.mubr.f32.mxu0 0.0
        %378 = vmatmul.mubr.f32.gmra.mrb[0].mxu0 %v267
        %v379 = vpop.f32.mrb[0].mxu0
        %v380 = vadd.f32 0.0, %v379
        %v381 = vpop.f32.mrb[0].mxu0
        %382 = vdwg.mxu0
        %v383 = vlaneseq
        %v384 = vand.u32 %v383, 127
        %385 = vset.pattern.permute.xlu0 0
        %386 = vperm.xlu0 %385, %v269
        %v387 = vpop.permute.xlu0 %386
        %388 = vset.pattern.permute.xlu0 0
        %389 = vperm.xlu0 %388, %v270
        %v390 = vpop.permute.xlu0 %389
        %391 = vset.pattern.permute.xlu0 0
        %392 = vperm.xlu0 %391, %v271
        %v393 = vpop.permute.xlu0 %392
        %394 = vset.pattern.permute.xlu0 0
        %395 = vperm.xlu0 %394, %v272
        %v396 = vpop.permute.xlu0 %395
        %397 = vset.pattern.permute.xlu0 0
        %398 = vperm.xlu0 %397, %v273
        %v399 = vpop.permute.xlu0 %398
        %400 = vset.pattern.permute.xlu0 0
        %401 = vperm.xlu0 %400, %v274
        %v402 = vpop.permute.xlu0 %401
        %403 = vset.pattern.permute.xlu0 0
        %404 = vperm.xlu0 %403, %v275
        %v405 = vpop.permute.xlu0 %404
        %406 = vset.pattern.permute.xlu0 0
        %407 = vperm.xlu0 %406, %v276
        %v408 = vpop.permute.xlu0 %407
        %vm409 = vcmp.eq.s32.totalorder %v387, %v384
        %vm410 = vcmp.eq.s32.totalorder %v390, %v384
        %vm411 = vcmp.eq.s32.totalorder %v393, %v384
        %vm412 = vcmp.eq.s32.totalorder %v396, %v384
        %vm413 = vcmp.eq.s32.totalorder %v399, %v384
        %vm414 = vcmp.eq.s32.totalorder %v402, %v384
        %vm415 = vcmp.eq.s32.totalorder %v405, %v384
        %vm416 = vcmp.eq.s32.totalorder %v408, %v384
        %v417 = vsel %vm409, 1, 0
        %v418 = vsel %vm410, 1, 0
        %v419 = vsel %vm411, 1, 0
        %v420 = vsel %vm412, 1, 0
        %v421 = vsel %vm413, 1, 0
        %v422 = vsel %vm414, 1, 0
        %v423 = vsel %vm415, 1, 0
        %v424 = vsel %vm416, 1, 0
        %v425 = vcvt.s32.f32 %v417
        %v426 = vcvt.s32.f32 %v418
        %v427 = vcvt.s32.f32 %v419
        %v428 = vcvt.s32.f32 %v420
        %v429 = vcvt.s32.f32 %v421
        %v430 = vcvt.s32.f32 %v422
        %v431 = vcvt.s32.f32 %v423
        %v432 = vcvt.s32.f32 %v424
        %v433 = vmul.f32 %v345, %v425
        %v434 = vmul.f32 %v350, %v426
        %v435 = vmul.f32 %v355, %v427
        %v436 = vmul.f32 %v360, %v428
        %v437 = vmul.f32 %v365, %v429
        %v438 = vmul.f32 %v370, %v430
        %v439 = vmul.f32 %v375, %v431
        %v440 = vmul.f32 %v380, %v432
        %vm441 = vcmask 39936
        %v442 = vsel %vm441, %v433, 0.0
        %443 = vadd.xlane.f32.xlu0 %v442
        %v444 = vpop.xlane.xlu0 %443
        %v445 = vsel %vm441, %v434, 0.0
        %446 = vadd.xlane.f32.xlu0 %v445
        %v447 = vpop.xlane.xlu0 %446
        %v448 = vsel %vm441, %v435, 0.0
        %449 = vadd.xlane.f32.xlu0 %v448
        %v450 = vpop.xlane.xlu0 %449
        %v451 = vsel %vm441, %v436, 0.0
        %452 = vadd.xlane.f32.xlu0 %v451
        %v453 = vpop.xlane.xlu0 %452
        %v454 = vsel %vm441, %v437, 0.0
        %455 = vadd.xlane.f32.xlu0 %v454
        %v456 = vpop.xlane.xlu0 %455
        %v457 = vsel %vm441, %v438, 0.0
        %458 = vadd.xlane.f32.xlu0 %v457
        %v459 = vpop.xlane.xlu0 %458
        %v460 = vsel %vm441, %v439, 0.0
        %461 = vadd.xlane.f32.xlu0 %v460
        %v462 = vpop.xlane.xlu0 %461
        %v463 = vsel %vm441, %v440, 0.0
        %464 = vadd.xlane.f32.xlu0 %v463
        %v465 = vpop.xlane.xlu0 %464
        %v467 = vlaneseq
        %v468 = vshrl.u32 %v467, 7
        %v469 = vsub.s32 0, %v468
        %v470 = vrot.slane %v277, %v469
        %v472 = vmul.f32 %v425, %v470
        %v473 = vmul.f32 %v426, %v470
        %v474 = vmul.f32 %v427, %v470
        %v475 = vmul.f32 %v428, %v470
        %v476 = vmul.f32 %v429, %v470
        %v477 = vmul.f32 %v430, %v470
        %v478 = vmul.f32 %v431, %v470
        %v479 = vmul.f32 %v432, %v470
        %v480 = vsel %vm441, %v472, 0.0
        %481 = vadd.xlane.f32.xlu0 %v480
        %v482 = vpop.xlane.xlu0 %481
        %v483 = vsel %vm441, %v473, 0.0
        %484 = vadd.xlane.f32.xlu0 %v483
        %v485 = vpop.xlane.xlu0 %484
        %v486 = vsel %vm441, %v474, 0.0
        %487 = vadd.xlane.f32.xlu0 %v486
        %v488 = vpop.xlane.xlu0 %487
        %v489 = vsel %vm441, %v475, 0.0
        %490 = vadd.xlane.f32.xlu0 %v489
        %v491 = vpop.xlane.xlu0 %490
        %v492 = vsel %vm441, %v476, 0.0
        %493 = vadd.xlane.f32.xlu0 %v492
        %v494 = vpop.xlane.xlu0 %493
        %v495 = vsel %vm441, %v477, 0.0
        %496 = vadd.xlane.f32.xlu0 %v495
        %v497 = vpop.xlane.xlu0 %496
        %v498 = vsel %vm441, %v478, 0.0
        %499 = vadd.xlane.f32.xlu0 %v498
        %v500 = vpop.xlane.xlu0 %499
        %v501 = vsel %vm441, %v479, 0.0
        %502 = vadd.xlane.f32.xlu0 %v501
        %v503 = vpop.xlane.xlu0 %502
        %v504 = vmul.f32 %v260, %v260
        %v505 = vmul.f32 %v261, %v261
        %v506 = vmul.f32 %v262, %v262
        %v507 = vmul.f32 %v263, %v263
        %v508 = vmul.f32 %v264, %v264
        %v509 = vmul.f32 %v265, %v265
        %v510 = vmul.f32 %v266, %v266
        %v511 = vmul.f32 %v267, %v267
        %512 = vadd.xlane.f32.xlu0 %v504
        %v513 = vpop.xlane.xlu0 %512
        %514 = vadd.xlane.f32.xlu0 %v505
        %v515 = vpop.xlane.xlu0 %514
        %516 = vadd.xlane.f32.xlu0 %v506
        %v517 = vpop.xlane.xlu0 %516
        %518 = vadd.xlane.f32.xlu0 %v507
        %v519 = vpop.xlane.xlu0 %518
        %520 = vadd.xlane.f32.xlu0 %v508
        %v521 = vpop.xlane.xlu0 %520
        %522 = vadd.xlane.f32.xlu0 %v509
        %v523 = vpop.xlane.xlu0 %522
        %524 = vadd.xlane.f32.xlu0 %v510
        %v525 = vpop.xlane.xlu0 %524
        %526 = vadd.xlane.f32.xlu0 %v511
        %v527 = vpop.xlane.xlu0 %526
        %v528 = vmul.f32 %v513, %v482
        %v529 = vmul.f32 %v515, %v485
        %v530 = vmul.f32 %v517, %v488
        %v531 = vmul.f32 %v519, %v491
        %v532 = vmul.f32 %v521, %v494
        %v533 = vmul.f32 %v523, %v497
        %v534 = vmul.f32 %v525, %v500
        %v535 = vmul.f32 %v527, %v503
        %v536 = vmax.f32 %v528, 1e-16
        %v537 = vmax.f32 %v529, 1e-16
        %v538 = vmax.f32 %v530, 1e-16
        %v539 = vmax.f32 %v531, 1e-16
        %v540 = vmax.f32 %v532, 1e-16
        %v541 = vmax.f32 %v533, 1e-16
        %v542 = vmax.f32 %v534, 1e-16
        %v543 = vmax.f32 %v535, 1e-16
        %v544 = vrsqrt.pop %v536
        %v545 = vrsqrt.pop %v537
        %v546 = vrsqrt.pop %v538
        %v547 = vrsqrt.pop %v539
        %v548 = vrsqrt.pop %v540
        %v549 = vrsqrt.pop %v541
        %v550 = vrsqrt.pop %v542
        %v551 = vrsqrt.pop %v543
        %v552 = vmul.f32 %v444, %v544
        %v553 = vmul.f32 %v447, %v545
        %v554 = vmul.f32 %v450, %v546
        %v555 = vmul.f32 %v453, %v547
        %v556 = vmul.f32 %v456, %v548
        %v557 = vmul.f32 %v459, %v549
        %v558 = vmul.f32 %v462, %v550
        %v559 = vmul.f32 %v465, %v551
        %s560 = smul.u32 %s18, 64
        %v561 = vlaneseq
        %v562 = vshrl.u32 %v561, 7
        %v563 = vadd.s32 %v562, 8
        %v564 = vadd.s32 %v562, 16
        %v565 = vadd.s32 %v562, 24
        %v566 = vadd.s32 %v562, 32
        %v567 = vadd.s32 %v562, 40
        %v568 = vadd.s32 %v562, 48
        %v569 = vadd.s32 %v562, 56
        %v570 = vstv %s560
        %v571 = vadd.s32 %v570, %v562
        %v572 = vadd.s32 %v570, %v563
        %v573 = vadd.s32 %v570, %v564
        %v574 = vadd.s32 %v570, %v565
        %v575 = vadd.s32 %v570, %v566
        %v576 = vadd.s32 %v570, %v567
        %v577 = vadd.s32 %v570, %v568
        %v578 = vadd.s32 %v570, %v569
        %vm579 = vcmp.lt.s32.totalorder %v571, 200
        %vm580 = vcmp.lt.s32.totalorder %v572, 200
        %vm581 = vcmp.lt.s32.totalorder %v573, 200
        %vm582 = vcmp.lt.s32.totalorder %v574, 200
        %vm583 = vcmp.lt.s32.totalorder %v575, 200
        %vm584 = vcmp.lt.s32.totalorder %v576, 200
        %vm585 = vcmp.lt.s32.totalorder %v577, 200
        %vm586 = vcmp.lt.s32.totalorder %v578, 200
        %v587 = vsel %vm579, %v552, 0.0
        %v588 = vsel %vm580, %v553, 0.0
        %v589 = vsel %vm581, %v554, 0.0
        %v590 = vsel %vm582, %v555, 0.0
        %v591 = vsel %vm583, %v556, 0.0
        %v592 = vsel %vm584, %v557, 0.0
        %v593 = vsel %vm585, %v558, 0.0
        %v594 = vsel %vm586, %v559, 0.0
        %vm595 = vcmask 7168
        %v596 = vsel %vm595, %v587, 0.0
        %v597 = vsel %vm595, %v588, 0.0
        %v598 = vadd.f32 %v596, %v597
        %v599 = vsel %vm595, %v589, 0.0
        %v600 = vadd.f32 %v598, %v599
        %v601 = vsel %vm595, %v590, 0.0
        %v602 = vadd.f32 %v600, %v601
        %v603 = vsel %vm595, %v591, 0.0
        %v604 = vadd.f32 %v602, %v603
        %v605 = vsel %vm595, %v592, 0.0
        %v606 = vadd.f32 %v604, %v605
        %v607 = vsel %vm595, %v593, 0.0
        %v608 = vadd.f32 %v606, %v607
        %v609 = vsel %vm595, %v594, 0.0
        %v610 = vadd.f32 %v608, %v609
        %611 = vadd.xlane.f32.xlu0 %v610
        %v612 = vpop.xlane.xlu0 %611
        %v613 = vrot.slane %v612, 4
        %v614 = vadd.f32 %v612, %v613
        %v615 = vrot.slane %v614, 2
        %v616 = vadd.f32 %v614, %v615
        %v617 = vrot.slane %v616, 1
        %v618 = vadd.f32 %v616, %v617
        %s619 = vtos %v618
        %v620 = vstv %s619
        %621 = vst [vmem:[%s231] sm:$0xff] %v620
        %s622 = sand.u32 %s120, 1
        %s623 = scalar_lea.sflag [#allocation3], %s622
        %s624 = sand.u32 %s120, 1
        %s625 = smul.addr %s624, 8
        %s626 = scalar_lea.vmem [#allocation2], %s625
        // Predicated region
        $region37: #{tpu_custom_call.1} parent=35 // pred_check
          %p627 = pneg %p130
        $region38: #{tpu_custom_call.1} parent=35 // pred_check_branch
          %629 = sbr.rel (%p627) target = $region40
        $region39: #{tpu_custom_call.1} parent=35 // pred_region
          %s631 = ssub.s32 128, 128
          %632 = vsyncadd %s623, %s631
          %s633 = smul.addr %s18, 128
          %s634 = scalar_lea.hbm %s4, %s633
          %s636 = sshll.u32 %s626, 4
          %s637 = int_to_ptr.vmem [resolvable:$true] %s636
          %639 = dma.vmem_to_hbm [thread:$0]  %s637, 128, %s634, %s623
        $region40: #{tpu_custom_call.1} parent=35 // pred_fallthru
          _
      $region36: #{tpu_custom_call.1} parent=5 // pred_fallthru
        _
      %p640 = scmp.le.s32.totalorder 2, %s13
      // Predicated region
      $region41: #{tpu_custom_call.1} parent=5 // pred_check
        %p641 = pneg %p640
      $region42: #{tpu_custom_call.1} parent=5 // pred_check_branch
        %643 = sbr.rel (%p641) target = $region44
      $region43: #{tpu_custom_call.1} parent=5 // pred_region
        %s644 = ssub.s32 %s13, 2
        // Predicated region
        $region45: #{tpu_custom_call.1} parent=43 // pred_check
          %p645 = pneg %p136
        $region46: #{tpu_custom_call.1} parent=43 // pred_check_branch
          %647 = sbr.rel (%p645) target = $region48
        $region47: #{tpu_custom_call.1} parent=43 // pred_region
          %s648 = sand.u32 %s121, 1
          %s649 = scalar_lea.sflag [#allocation3], %s648
          %s650 = sand.u32 %s121, 1
          %s651 = smul.addr %s650, 8
          %s652 = scalar_lea.vmem [#allocation2], %s651
          %653 = dma.done %s649, 128
        $region48: #{tpu_custom_call.1} parent=43 // pred_fallthru
          _
      $region44: #{tpu_custom_call.1} parent=5 // pred_fallthru
        _
    $region6: #{tpu_custom_call.1} parent=1 // loop_footer
      %s17 = sadd.s32 1, %s13
    $region7: #{tpu_custom_call.1} parent=1 // loop_footer_branch
      %12 = sbr.rel target = $region3
    $region8: #{tpu_custom_call.1} parent=1 // loop_exit
      _
    %654 = vsyncpa [#allocation3], 1
    %s655 = scalar_lea.sflag [#allocation3], 1
    %656 = vsyncpa %s655, 1

</llo_original>
